<compile_context>
chip_gen: v5e
topology: v5e:2x2
jax: 0.10.0
libtpu: 0.0.40
codegen_flags: <defaults>
</compile_context>

<pallas_src>
import jax
import jax.numpy as jnp
from jax.experimental import pallas as pl
from jax.experimental.pallas import tpu as pltpu

LANE = 128


def _round_up(x, m):
    return ((x + m - 1) // m) * m


def classification_fwd_kernel(patches_ref, wc_ref, bc_ref,
                              w1_ref, b1_ref, w2_ref, b2_ref, out_ref):
    B, HW, P = patches_ref.shape

    # ---- conv3x3 (im2col form) as one bf16 MXU matmul over the batch tile --
    patches = patches_ref[...].reshape(B * HW, P)                  # bf16, K = Cin*9
    conv = jnp.dot(patches, wc_ref[...],
                   preferred_element_type=jnp.float32)             # (B*HW, Cout) f32
    conv = jnp.maximum(conv + bc_ref[...], 0.0)                    # bias + ReLU (f32)

    # ---- global average pool: sublane reduction (XLU slot, not the MXU) ----
    # 1/HW is folded into w1 in the wrapper, so a plain sum suffices.
    feats = jnp.sum(conv.reshape(B, HW, -1), axis=1)               # (B, Cout) f32

    # ---- classifier head: Linear -> Dropout(identity) -> ReLU -> Linear ----
    h = jnp.dot(feats.astype(w1_ref.dtype), w1_ref[...],
                preferred_element_type=jnp.float32) + b1_ref[...]  # (B, F//2)
    h = jnp.maximum(h, 0.0)
    logits = jnp.dot(h.astype(w2_ref.dtype), w2_ref[...],
                     preferred_element_type=jnp.float32) + b2_ref[...]  # (B, Cpad)

    out_ref[...] = logits                                          # lane-dense f32


def _pick_batch_tile(N, max_tile=128):
    """Adaptive batch tile: exact for tiny N; multiple of 8 with >=2 grid steps otherwise."""
    if N <= 8:
        return N, N                      # single step, zero padded-row compute
    B = min(max_tile, _round_up(pl.cdiv(N, 2), 8))
    return B, _round_up(N, B)


def classification_model_forward(images, params, *, max_batch_tile=128):
    """images: (N, Cin, H, W) float32 (PyTorch NCHW). Returns (N, num_classes)."""
    wc, bc, w1, b1, w2, b2 = (params[k] for k in
                              ("wc", "bc", "w1", "b1", "w2", "b2"))
    N, Cin, H, W = images.shape
    KH = KW = 3
    P = Cin * KH * KW
    HW = H * W
    num_classes = w2.shape[1]
    Cpad = _round_up(num_classes, LANE)

    B, Npad = _pick_batch_tile(N, max_batch_tile)

    # --- glue: im2col (padding=1, stride=1), built directly in (N, HW, P) order
    # feature ordering is (c, kh, kw) fast->slow, matching the weight reshape.
    xp = jnp.pad(images, ((0, 0), (0, 0), (1, 1), (1, 1)))
    taps = [xp[:, c, i:i + H, j:j + W]
            for c in range(Cin) for i in range(KH) for j in range(KW)]
    patches = jnp.stack(taps, axis=-1).reshape(N, HW, P)           # (N, HW, P) f32
    patches = jnp.pad(patches, ((0, Npad - N), (0, 0), (0, 0)))
    patches = patches.astype(jnp.bfloat16)                         # no lane padding in HBM

    # --- weight casts / padding (padded cols are zero -> exact result) ------
    wc_b = wc.astype(jnp.bfloat16)                                 # (P, Cout)
    w1_b = (w1 * (1.0 / HW)).astype(jnp.bfloat16)                  # fold 1/HW of the GAP
    w2_p = jnp.pad(w2, ((0, 0), (0, Cpad - num_classes))).astype(jnp.bfloat16)
    b2_p = jnp.pad(b2, ((0, 0), (0, Cpad - num_classes)))          # (1, Cpad) f32

    def full(a):
        return pl.BlockSpec(a.shape, lambda n: (0,) * a.ndim)

    logits_pad = pl.pallas_call(
        classification_fwd_kernel,
        out_shape=jax.ShapeDtypeStruct((Npad, Cpad), jnp.float32),
        grid_spec=pltpu.PrefetchScalarGridSpec(
            num_scalar_prefetch=0,
            grid=(Npad // B,),
            in_specs=[
                pl.BlockSpec((B, HW, P), lambda n: (n, 0, 0)),     # patches tile
                full(wc_b),                                        # (P, Cout)
                full(bc),                                          # (1, Cout)
                full(w1_b),                                        # (Cout, Cout//2)
                full(b1),                                          # (1, Cout//2)
                full(w2_p),                                        # (Cout//2, Cpad)
                full(b2_p),                                        # (1, Cpad)
            ],
            out_specs=pl.BlockSpec((B, Cpad), lambda n: (n, 0)),
        ),
        compiler_params=pltpu.CompilerParams(
            dimension_semantics=("parallel",),
            vmem_limit_bytes=32 * 1024 * 1024),
    )(patches, wc_b, bc, w1_b, b1, w2_p, b2_p)

    return logits_pad[:N, :num_classes]


def init_params(key, cin, feature_output_size, num_classes):
    """Deterministic synthetic parameters (shapes follow the module's __init__)."""
    k = jax.random.split(key, 6)
    KH = KW = 3
    P = cin * KH * KW
    F = feature_output_size
    scale = lambda fan_in: 1.0 / jnp.sqrt(jnp.float32(fan_in))
    # conv weight stored already reshaped/transposed for the matmul: (P, F),
    # row ordering (c, kh, kw) fast->slow to match the im2col glue.
    wc = jax.random.normal(k[0], (F, cin, KH, KW), jnp.float32)
    wc = (wc * scale(P)).reshape(F, P).T                           # (P, F)
    bc = jax.random.normal(k[1], (1, F), jnp.float32) * scale(P)
    w1 = jax.random.normal(k[2], (F, F // 2), jnp.float32) * scale(F)
    b1 = jax.random.normal(k[3], (1, F // 2), jnp.float32) * scale(F)
    w2 = jax.random.normal(k[4], (F // 2, num_classes), jnp.float32) * scale(F // 2)
    b2 = jax.random.normal(k[5], (1, num_classes), jnp.float32) * scale(F // 2)
    return dict(wc=wc, bc=bc, w1=w1, b1=b1, w2=w2, b2=b2)


def _reference_forward(images, params):
    """Pure-JAX f32 reference of the same synthetic extractor + exact head."""
    wc, bc, w1, b1, w2, b2 = (params[k] for k in
                              ("wc", "bc", "w1", "b1", "w2", "b2"))
    N, Cin, H, W = images.shape
    KH = KW = 3
    xp = jnp.pad(images, ((0, 0), (0, 0), (1, 1), (1, 1)))
    taps = [xp[:, c, i:i + H, j:j + W]
            for c in range(Cin) for i in range(KH) for j in range(KW)]
    patches = jnp.stack(taps, axis=-1).reshape(N, H * W, Cin * KH * KW)
    conv = jnp.maximum(patches @ wc + bc, 0.0)        # (N, HW, F)
    feats = jnp.mean(conv, axis=1)                    # (N, F)
    h = jnp.maximum(feats @ w1 + b1, 0.0)
    return h @ w2 + b2                                # (N, num_classes)


if __name__ == "__main__":
    # small shapes consistent with the forward pass
    N, Cin, H, W = 2, 4, 16, 16
    feature_output_size = 32          # stands in for e.g. resnet50's 2048
    num_classes = 10

    key = jax.random.PRNGKey(0)
    k_img, k_par = jax.random.split(key)
    images = jax.random.normal(k_img, (N, Cin, H, W), jnp.float32)
    params = init_params(k_par, Cin, feature_output_size, num_classes)

    logits = classification_model_forward(images, params)
    logits = jax.block_until_ready(logits)

    assert logits.shape == (N, num_classes)
    assert bool(jnp.all(jnp.isfinite(logits)))

    # tolerance check vs. pure-f32 JAX reference (kernel uses bf16 MXU operands)
    ref = _reference_forward(images, params)
    max_err = float(jnp.max(jnp.abs(logits - ref)))
    assert max_err < 5e-2, f"max abs error vs f32 reference: {max_err}"

    print("KERNEL_OK")
</pallas_src>

<mosaic_0001>
module attributes {stable_mosaic.version = 11 : i64} {
  func.func @classification_fwd_kernel(%arg0: i32, %arg1: memref<2x256x36xbf16, #tpu.memory_space<vmem>>, %arg2: memref<36x32xbf16, #tpu.memory_space<vmem>>, %arg3: memref<1x32xf32, #tpu.memory_space<vmem>>, %arg4: memref<32x16xbf16, #tpu.memory_space<vmem>>, %arg5: memref<1x16xf32, #tpu.memory_space<vmem>>, %arg6: memref<16x128xbf16, #tpu.memory_space<vmem>>, %arg7: memref<1x128xf32, #tpu.memory_space<vmem>>, %arg8: memref<2x128xf32, #tpu.memory_space<vmem>>) attributes {dimension_semantics = [#tpu.dimension_semantics<parallel>], iteration_bounds = array<i64: 1>, scalar_prefetch = 0 : i64, scratch_operands = 0 : i64, tpu.core_type = #tpu.core_type<tc>, window_params = [{transform_indices = @transform_0, window_bounds = array<i64: 2, 256, 36>}, {pipeline_mode = #tpu.pipeline_mode<synchronous>, transform_indices = @transform_1, window_bounds = array<i64: 36, 32>}, {pipeline_mode = #tpu.pipeline_mode<synchronous>, transform_indices = @transform_2, window_bounds = array<i64: 1, 32>}, {pipeline_mode = #tpu.pipeline_mode<synchronous>, transform_indices = @transform_3, window_bounds = array<i64: 32, 16>}, {pipeline_mode = #tpu.pipeline_mode<synchronous>, transform_indices = @transform_4, window_bounds = array<i64: 1, 16>}, {pipeline_mode = #tpu.pipeline_mode<synchronous>, transform_indices = @transform_5, window_bounds = array<i64: 16, 128>}, {pipeline_mode = #tpu.pipeline_mode<synchronous>, transform_indices = @transform_6, window_bounds = array<i64: 1, 128>}, {transform_indices = @transform_7, window_bounds = array<i64: 2, 128>}]} {
    %c0 = arith.constant 0 : index
    %c0_0 = arith.constant 0 : index
    %c0_1 = arith.constant 0 : index
    %0 = vector.load %arg1[%c0, %c0_0, %c0_1] : memref<2x256x36xbf16, #tpu.memory_space<vmem>>, vector<2x256x36xbf16>
    %1 = vector.shape_cast %0 : vector<2x256x36xbf16> to vector<512x36xbf16>
    %c0_2 = arith.constant 0 : index
    %c0_3 = arith.constant 0 : index
    %2 = vector.load %arg2[%c0_2, %c0_3] : memref<36x32xbf16, #tpu.memory_space<vmem>>, vector<36x32xbf16>
    %cst = arith.constant dense<0.000000e+00> : vector<512x32xf32>
    %3 = tpu.matmul %1, %2, %cst {dimension_numbers = #tpu.dot_dimension_numbers<[1], [0], [0], [1], [0, 0, 1, 1], [], []>} : vector<512x36xbf16>, vector<36x32xbf16>, vector<512x32xf32> -> vector<512x32xf32>
    %c0_4 = arith.constant 0 : index
    %c0_5 = arith.constant 0 : index
    %4 = vector.load %arg3[%c0_4, %c0_5] : memref<1x32xf32, #tpu.memory_space<vmem>>, vector<1x32xf32>
    %5 = vector.broadcast %4 : vector<1x32xf32> to vector<512x32xf32>
    %6 = arith.addf %3, %5 : vector<512x32xf32>
    %cst_6 = arith.constant 0.000000e+00 : f32
    %7 = vector.broadcast %cst_6 : f32 to vector<512x32xf32>
    %8 = arith.maximumf %6, %7 : vector<512x32xf32>
    %9 = vector.shape_cast %8 : vector<512x32xf32> to vector<2x256x32xf32>
    %cst_7 = arith.constant dense<0.000000e+00> : vector<2x32xf32>
    %10 = vector.multi_reduction <add>, %9, %cst_7 [1] : vector<2x256x32xf32> to vector<2x32xf32>
    %11 = arith.truncf %10 : vector<2x32xf32> to vector<2x32xbf16>
    %c0_8 = arith.constant 0 : index
    %c0_9 = arith.constant 0 : index
    %12 = vector.load %arg4[%c0_8, %c0_9] : memref<32x16xbf16, #tpu.memory_space<vmem>>, vector<32x16xbf16>
    %cst_10 = arith.constant dense<0.000000e+00> : vector<2x16xf32>
    %13 = tpu.matmul %11, %12, %cst_10 {dimension_numbers = #tpu.dot_dimension_numbers<[1], [0], [0], [1], [0, 0, 1, 1], [], []>} : vector<2x32xbf16>, vector<32x16xbf16>, vector<2x16xf32> -> vector<2x16xf32>
    %c0_11 = arith.constant 0 : index
    %c0_12 = arith.constant 0 : index
    %14 = vector.load %arg5[%c0_11, %c0_12] : memref<1x16xf32, #tpu.memory_space<vmem>>, vector<1x16xf32>
    %15 = vector.broadcast %14 : vector<1x16xf32> to vector<2x16xf32>
    %16 = arith.addf %13, %15 : vector<2x16xf32>
    %cst_13 = arith.constant 0.000000e+00 : f32
    %17 = vector.broadcast %cst_13 : f32 to vector<2x16xf32>
    %18 = arith.maximumf %16, %17 : vector<2x16xf32>
    %19 = arith.truncf %18 : vector<2x16xf32> to vector<2x16xbf16>
    %c0_14 = arith.constant 0 : index
    %c0_15 = arith.constant 0 : index
    %20 = vector.load %arg6[%c0_14, %c0_15] : memref<16x128xbf16, #tpu.memory_space<vmem>>, vector<16x128xbf16>
    %cst_16 = arith.constant dense<0.000000e+00> : vector<2x128xf32>
    %21 = tpu.matmul %19, %20, %cst_16 {dimension_numbers = #tpu.dot_dimension_numbers<[1], [0], [0], [1], [0, 0, 1, 1], [], []>} : vector<2x16xbf16>, vector<16x128xbf16>, vector<2x128xf32> -> vector<2x128xf32>
    %c0_17 = arith.constant 0 : index
    %c0_18 = arith.constant 0 : index
    %22 = vector.load %arg7[%c0_17, %c0_18] : memref<1x128xf32, #tpu.memory_space<vmem>>, vector<1x128xf32>
    %23 = vector.broadcast %22 : vector<1x128xf32> to vector<2x128xf32>
    %24 = arith.addf %21, %23 : vector<2x128xf32>
    %c0_19 = arith.constant 0 : index
    %c0_20 = arith.constant 0 : index
    %25 = vector.load %arg8[%c0_19, %c0_20] : memref<2x128xf32, #tpu.memory_space<vmem>>, vector<2x128xf32>
    tpu.vector_store %arg8[%c0_19, %c0_20], %24 {strides = array<i32>} : memref<2x128xf32, #tpu.memory_space<vmem>>, vector<2x128xf32>,
    return
  }
  func.func @transform_0(%arg0: i32) -> (i32, i32, i32) {
    %c0_i32 = arith.constant 0 : i32
    %c0_i32_0 = arith.constant 0 : i32
    %c0_i32_1 = arith.constant 0 : i32
    return %arg0, %c0_i32, %c0_i32_0 : i32, i32, i32
  }
  func.func @transform_1(%arg0: i32) -> (i32, i32) {
    %c0_i32 = arith.constant 0 : i32
    %c0_i32_0 = arith.constant 0 : i32
    %c0_i32_1 = arith.constant 0 : i32
    return %c0_i32, %c0_i32_0 : i32, i32
  }
  func.func @transform_2(%arg0: i32) -> (i32, i32) {
    %c0_i32 = arith.constant 0 : i32
    %c0_i32_0 = arith.constant 0 : i32
    %c0_i32_1 = arith.constant 0 : i32
    return %c0_i32, %c0_i32_0 : i32, i32
  }
  func.func @transform_3(%arg0: i32) -> (i32, i32) {
    %c0_i32 = arith.constant 0 : i32
    %c0_i32_0 = arith.constant 0 : i32
    %c0_i32_1 = arith.constant 0 : i32
    return %c0_i32, %c0_i32_0 : i32, i32
  }
  func.func @transform_4(%arg0: i32) -> (i32, i32) {
    %c0_i32 = arith.constant 0 : i32
    %c0_i32_0 = arith.constant 0 : i32
    %c0_i32_1 = arith.constant 0 : i32
    return %c0_i32, %c0_i32_0 : i32, i32
  }
  func.func @transform_5(%arg0: i32) -> (i32, i32) {
    %c0_i32 = arith.constant 0 : i32
    %c0_i32_0 = arith.constant 0 : i32
    %c0_i32_1 = arith.constant 0 : i32
    return %c0_i32, %c0_i32_0 : i32, i32
  }
  func.func @transform_6(%arg0: i32) -> (i32, i32) {
    %c0_i32 = arith.constant 0 : i32
    %c0_i32_0 = arith.constant 0 : i32
    %c0_i32_1 = arith.constant 0 : i32
    return %c0_i32, %c0_i32_0 : i32, i32
  }
  func.func @transform_7(%arg0: i32) -> (i32, i32) {
    %c0_i32 = arith.constant 0 : i32
    %c0_i32_0 = arith.constant 0 : i32
    return %arg0, %c0_i32 : i32, i32
  }
}

</mosaic_0001>

<llo_original>
// kernel: tpu_custom_call.1
$region0: #{tpu_custom_call.1}
  #allocation0 [shape = 'u32[]', space=smem, size = 0x4, offset = 0x4, fixed_abs, tag = 'smem constant byte address 0x4 - core index']
  #allocation1 [shape = 'u32[72,128]{1,0:T(1,128)}', space=vmem, size = 0x9000, scoped, tag = 'internal scratch']
  %s0 = inlined_call_operand.vmem [shape: bf16[2,256,36], index: 0, kind: input, shape index: {}]
  %s1 = inlined_call_operand.vmem [shape: bf16[36,32], index: 1, kind: input, shape index: {}]
  %s2 = inlined_call_operand.vmem [shape: f32[1,32], index: 2, kind: input, shape index: {}]
  %s3 = inlined_call_operand.vmem [shape: bf16[32,16], index: 3, kind: input, shape index: {}]
  %s4 = inlined_call_operand.vmem [shape: f32[1,16], index: 4, kind: input, shape index: {}]
  %s5 = inlined_call_operand.vmem [shape: bf16[16,128], index: 5, kind: input, shape index: {}]
  %s6 = inlined_call_operand.vmem [shape: f32[1,128], index: 6, kind: input, shape index: {}]
  %s7 = inlined_call_operand.hbm [shape: f32[2,128], index: 7, kind: output, shape index: {}]
  %s8 = sld [smem:[#allocation0]]
  $region38: #{tpu_custom_call.1} parent=0
    _
  %s10 = ssub.s32 1, %s8
  %s11 = scalar_select 0, %s10, %s8
  $region1: #{tpu_custom_call.1} parent=0
    #allocation2 [shape = 'u8[1024]{0}', space=vmem, size = 0x400, scoped, tag = 'output window, operand 0, single buffered']
    #allocation3 [shape = 's32[1]{0}', space=sflag, size = 0x4, scoped, tag = 'scoped memory for tpu_custom_call.1']
    %12 = vsyncpa [#allocation3], 0
    // Predicated region
    $region2: #{tpu_custom_call.1} parent=1 // pred_check
      _
    $region3: #{tpu_custom_call.1} parent=1 // pred_check_branch
      %14 = sbr.rel (0) target = $region5
    $region4: #{tpu_custom_call.1} parent=1 // pred_region
      _
    $region5: #{tpu_custom_call.1} parent=1 // pred_fallthru
      _
    // Predicated region
    $region6: #{tpu_custom_call.1} parent=1 // pred_check
      _
    $region7: #{tpu_custom_call.1} parent=1 // pred_check_branch
      %16 = sbr.rel (0) target = $region9
    $region8: #{tpu_custom_call.1} parent=1 // pred_region
      _
    $region9: #{tpu_custom_call.1} parent=1 // pred_fallthru
      _
    // Predicated region
    $region10: #{tpu_custom_call.1} parent=1 // pred_check
      _
    $region11: #{tpu_custom_call.1} parent=1 // pred_check_branch
      %18 = sbr.rel (0) target = $region13
    $region12: #{tpu_custom_call.1} parent=1 // pred_region
      _
    $region13: #{tpu_custom_call.1} parent=1 // pred_fallthru
      _
    // Predicated region
    $region14: #{tpu_custom_call.1} parent=1 // pred_check
      _
    $region15: #{tpu_custom_call.1} parent=1 // pred_check_branch
      %20 = sbr.rel (0) target = $region17
    $region16: #{tpu_custom_call.1} parent=1 // pred_region
      _
    $region17: #{tpu_custom_call.1} parent=1 // pred_fallthru
      _
    // Predicated region
    $region18: #{tpu_custom_call.1} parent=1 // pred_check
      _
    $region19: #{tpu_custom_call.1} parent=1 // pred_check_branch
      %22 = sbr.rel (0) target = $region21
    $region20: #{tpu_custom_call.1} parent=1 // pred_region
      _
    $region21: #{tpu_custom_call.1} parent=1 // pred_fallthru
      _
    // Predicated region
    $region22: #{tpu_custom_call.1} parent=1 // pred_check
      _
    $region23: #{tpu_custom_call.1} parent=1 // pred_check_branch
      %24 = sbr.rel (0) target = $region25
    $region24: #{tpu_custom_call.1} parent=1 // pred_region
      _
    $region25: #{tpu_custom_call.1} parent=1 // pred_fallthru
      _
    // Predicated region
    $region26: #{tpu_custom_call.1} parent=1 // pred_check
      _
    $region27: #{tpu_custom_call.1} parent=1 // pred_check_branch
      %26 = sbr.rel (0) target = $region29
    $region28: #{tpu_custom_call.1} parent=1 // pred_region
      _
    $region29: #{tpu_custom_call.1} parent=1 // pred_fallthru
      _
    %v28 = vld [vmem:[%s0] sm:$0xf]
    %v29 = vld [vmem:[%s0 + $0x4] sm:$0xf]
    %v30 = vld [vmem:[%s0 + $0x8] sm:$0xf]
    %v31 = vld [vmem:[%s0 + $0xc] sm:$0xf]
    %v32 = vld [vmem:[%s0 + $0x10] sm:$0xf]
    %v33 = vld [vmem:[%s0 + $0x14] sm:$0xf]
    %v34 = vld [vmem:[%s0 + $0x18] sm:$0xf]
    %v35 = vld [vmem:[%s0 + $0x1c] sm:$0xf]
    %v36 = vld [vmem:[%s0 + $0x20] sm:$0xf]
    %v37 = vld [vmem:[%s0 + $0x24] sm:$0xf]
    %v38 = vld [vmem:[%s0 + $0x28] sm:$0xf]
    %v39 = vld [vmem:[%s0 + $0x2c] sm:$0xf]
    %v40 = vld [vmem:[%s0 + $0x30] sm:$0xf]
    %v41 = vld [vmem:[%s0 + $0x34] sm:$0xf]
    %v42 = vld [vmem:[%s0 + $0x38] sm:$0xf]
    %v43 = vld [vmem:[%s0 + $0x3c] sm:$0xf]
    %v44 = vld [vmem:[%s0 + $0x40] sm:$0xf]
    %v45 = vld [vmem:[%s0 + $0x44] sm:$0xf]
    %v46 = vld [vmem:[%s0 + $0x48] sm:$0xf]
    %v47 = vld [vmem:[%s0 + $0x4c] sm:$0xf]
    %v48 = vld [vmem:[%s0 + $0x50] sm:$0xf]
    %v49 = vld [vmem:[%s0 + $0x54] sm:$0xf]
    %v50 = vld [vmem:[%s0 + $0x58] sm:$0xf]
    %v51 = vld [vmem:[%s0 + $0x5c] sm:$0xf]
    %v52 = vld [vmem:[%s0 + $0x60] sm:$0xf]
    %v53 = vld [vmem:[%s0 + $0x64] sm:$0xf]
    %v54 = vld [vmem:[%s0 + $0x68] sm:$0xf]
    %v55 = vld [vmem:[%s0 + $0x6c] sm:$0xf]
    %v56 = vld [vmem:[%s0 + $0x70] sm:$0xf]
    %v57 = vld [vmem:[%s0 + $0x74] sm:$0xf]
    %v58 = vld [vmem:[%s0 + $0x78] sm:$0xf]
    %v59 = vld [vmem:[%s0 + $0x7c] sm:$0xf]
    %v60 = vld [vmem:[%s0 + $0x80] sm:$0xf]
    %v61 = vld [vmem:[%s0 + $0x84] sm:$0xf]
    %v62 = vld [vmem:[%s0 + $0x88] sm:$0xf]
    %v63 = vld [vmem:[%s0 + $0x8c] sm:$0xf]
    %v64 = vld [vmem:[%s0 + $0x90] sm:$0xf]
    %v65 = vld [vmem:[%s0 + $0x94] sm:$0xf]
    %v66 = vld [vmem:[%s0 + $0x98] sm:$0xf]
    %v67 = vld [vmem:[%s0 + $0x9c] sm:$0xf]
    %v68 = vld [vmem:[%s0 + $0xa0] sm:$0xf]
    %v69 = vld [vmem:[%s0 + $0xa4] sm:$0xf]
    %v70 = vld [vmem:[%s0 + $0xa8] sm:$0xf]
    %v71 = vld [vmem:[%s0 + $0xac] sm:$0xf]
    %v72 = vld [vmem:[%s0 + $0xb0] sm:$0xf]
    %v73 = vld [vmem:[%s0 + $0xb4] sm:$0xf]
    %v74 = vld [vmem:[%s0 + $0xb8] sm:$0xf]
    %v75 = vld [vmem:[%s0 + $0xbc] sm:$0xf]
    %v76 = vld [vmem:[%s0 + $0xc0] sm:$0xf]
    %v77 = vld [vmem:[%s0 + $0xc4] sm:$0xf]
    %v78 = vld [vmem:[%s0 + $0xc8] sm:$0xf]
    %v79 = vld [vmem:[%s0 + $0xcc] sm:$0xf]
    %v80 = vld [vmem:[%s0 + $0xd0] sm:$0xf]
    %v81 = vld [vmem:[%s0 + $0xd4] sm:$0xf]
    %v82 = vld [vmem:[%s0 + $0xd8] sm:$0xf]
    %v83 = vld [vmem:[%s0 + $0xdc] sm:$0xf]
    %v84 = vld [vmem:[%s0 + $0xe0] sm:$0xf]
    %v85 = vld [vmem:[%s0 + $0xe4] sm:$0xf]
    %v86 = vld [vmem:[%s0 + $0xe8] sm:$0xf]
    %v87 = vld [vmem:[%s0 + $0xec] sm:$0xf]
    %v88 = vld [vmem:[%s0 + $0xf0] sm:$0xf]
    %v89 = vld [vmem:[%s0 + $0xf4] sm:$0xf]
    %v90 = vld [vmem:[%s0 + $0xf8] sm:$0xf]
    %v91 = vld [vmem:[%s0 + $0xfc] sm:$0xf]
    %v92 = vld [vmem:[%s1] sm:$0xf]
    %v93 = vld [vmem:[%s1 + $0x4] sm:$0xf]
    %v94 = vld [vmem:[%s1 + $0x8] sm:$0xf]
    %v95 = vld [vmem:[%s1 + $0xc] sm:$0xf]
    %v96 = vld [vmem:[%s1 + $0x10] sm:$0x3]
    %v97 = vld [vmem:[%s2] sm:$0x1]
    %v99 = vperm.slane %v97, 0
    %v165 = vunpack.c.l.b16 %v28
    %v166 = vunpack.c.l.b16 %v29
    %v167 = vunpack.c.l.b16 %v30
    %v168 = vunpack.c.l.b16 %v31
    %v169 = vunpack.c.l.b16 %v32
    %v170 = vunpack.c.l.b16 %v33
    %v171 = vunpack.c.l.b16 %v34
    %v172 = vunpack.c.l.b16 %v35
    %v173 = vunpack.c.l.b16 %v36
    %v174 = vunpack.c.l.b16 %v37
    %v175 = vunpack.c.l.b16 %v38
    %v176 = vunpack.c.l.b16 %v39
    %v177 = vunpack.c.l.b16 %v40
    %v178 = vunpack.c.l.b16 %v41
    %v179 = vunpack.c.l.b16 %v42
    %v180 = vunpack.c.l.b16 %v43
    %v181 = vunpack.c.l.b16 %v44
    %v182 = vunpack.c.l.b16 %v45
    %v183 = vunpack.c.l.b16 %v46
    %v184 = vunpack.c.l.b16 %v47
    %v185 = vunpack.c.l.b16 %v48
    %v186 = vunpack.c.l.b16 %v49
    %v187 = vunpack.c.l.b16 %v50
    %v188 = vunpack.c.l.b16 %v51
    %v189 = vunpack.c.l.b16 %v52
    %v190 = vunpack.c.l.b16 %v53
    %v191 = vunpack.c.l.b16 %v54
    %v192 = vunpack.c.l.b16 %v55
    %v193 = vunpack.c.l.b16 %v56
    %v194 = vunpack.c.l.b16 %v57
    %v195 = vunpack.c.l.b16 %v58
    %v196 = vunpack.c.l.b16 %v59
    %v197 = vunpack.c.l.b16 %v60
    %v198 = vunpack.c.l.b16 %v61
    %v199 = vunpack.c.l.b16 %v62
    %v200 = vunpack.c.l.b16 %v63
    %v201 = vunpack.c.l.b16 %v64
    %v202 = vunpack.c.l.b16 %v65
    %v203 = vunpack.c.l.b16 %v66
    %v204 = vunpack.c.l.b16 %v67
    %v205 = vunpack.c.l.b16 %v68
    %v206 = vunpack.c.l.b16 %v69
    %v207 = vunpack.c.l.b16 %v70
    %v208 = vunpack.c.l.b16 %v71
    %v209 = vunpack.c.l.b16 %v72
    %v210 = vunpack.c.l.b16 %v73
    %v211 = vunpack.c.l.b16 %v74
    %v212 = vunpack.c.l.b16 %v75
    %v213 = vunpack.c.l.b16 %v76
    %v214 = vunpack.c.l.b16 %v77
    %v215 = vunpack.c.l.b16 %v78
    %v216 = vunpack.c.l.b16 %v79
    %v217 = vunpack.c.l.b16 %v80
    %v218 = vunpack.c.l.b16 %v81
    %v219 = vunpack.c.l.b16 %v82
    %v220 = vunpack.c.l.b16 %v83
    %v221 = vunpack.c.l.b16 %v84
    %v222 = vunpack.c.l.b16 %v85
    %v223 = vunpack.c.l.b16 %v86
    %v224 = vunpack.c.l.b16 %v87
    %v225 = vunpack.c.l.b16 %v88
    %v226 = vunpack.c.l.b16 %v89
    %v227 = vunpack.c.l.b16 %v90
    %v228 = vunpack.c.l.b16 %v91
    %v229 = vpack.c.b16 %v166, %v165
    %v230 = vpack.c.b16 %v168, %v167
    %v231 = vpack.c.b16 %v170, %v169
    %v232 = vpack.c.b16 %v172, %v171
    %v233 = vpack.c.b16 %v174, %v173
    %v234 = vpack.c.b16 %v176, %v175
    %v235 = vpack.c.b16 %v178, %v177
    %v236 = vpack.c.b16 %v180, %v179
    %v237 = vpack.c.b16 %v182, %v181
    %v238 = vpack.c.b16 %v184, %v183
    %v239 = vpack.c.b16 %v186, %v185
    %v240 = vpack.c.b16 %v188, %v187
    %v241 = vpack.c.b16 %v190, %v189
    %v242 = vpack.c.b16 %v192, %v191
    %v243 = vpack.c.b16 %v194, %v193
    %v244 = vpack.c.b16 %v196, %v195
    %v245 = vpack.c.b16 %v198, %v197
    %v246 = vpack.c.b16 %v200, %v199
    %v247 = vpack.c.b16 %v202, %v201
    %v248 = vpack.c.b16 %v204, %v203
    %v249 = vpack.c.b16 %v206, %v205
    %v250 = vpack.c.b16 %v208, %v207
    %v251 = vpack.c.b16 %v210, %v209
    %v252 = vpack.c.b16 %v212, %v211
    %v253 = vpack.c.b16 %v214, %v213
    %v254 = vpack.c.b16 %v216, %v215
    %v255 = vpack.c.b16 %v218, %v217
    %v256 = vpack.c.b16 %v220, %v219
    %v257 = vpack.c.b16 %v222, %v221
    %v258 = vpack.c.b16 %v224, %v223
    %v259 = vpack.c.b16 %v226, %v225
    %v260 = vpack.c.b16 %v228, %v227
    %v266 = vunpack.c.l.b16 %v92
    %v267 = vunpack.c.l.b16 %v93
    %v268 = vunpack.c.l.b16 %v94
    %v269 = vunpack.c.l.b16 %v95
    %v270 = vunpack.c.l.b16 %v96
    %v271 = vpack.c.b16 %v267, %v266
    %v272 = vpack.c.b16 %v269, %v268
    %v273 = vpack.c.b16 %v270, %v270
    %vm276 = vcmask 293888
    %v278 = vsel %vm276, %v229, 0
    %v281 = vsel %vm276, %v230, 0
    %v284 = vsel %vm276, %v231, 0
    %v287 = vsel %vm276, %v232, 0
    %v290 = vsel %vm276, %v233, 0
    %v293 = vsel %vm276, %v234, 0
    %v296 = vsel %vm276, %v235, 0
    %v299 = vsel %vm276, %v236, 0
    %v302 = vsel %vm276, %v237, 0
    %v305 = vsel %vm276, %v238, 0
    %v308 = vsel %vm276, %v239, 0
    %v311 = vsel %vm276, %v240, 0
    %v314 = vsel %vm276, %v241, 0
    %v317 = vsel %vm276, %v242, 0
    %v320 = vsel %vm276, %v243, 0
    %v323 = vsel %vm276, %v244, 0
    %v326 = vsel %vm276, %v245, 0
    %v329 = vsel %vm276, %v246, 0
    %v332 = vsel %vm276, %v247, 0
    %v335 = vsel %vm276, %v248, 0
    %v338 = vsel %vm276, %v249, 0
    %v341 = vsel %vm276, %v250, 0
    %v344 = vsel %vm276, %v251, 0
    %v347 = vsel %vm276, %v252, 0
    %v350 = vsel %vm276, %v253, 0
    %v353 = vsel %vm276, %v254, 0
    %v356 = vsel %vm276, %v255, 0
    %v359 = vsel %vm276, %v256, 0
    %v362 = vsel %vm276, %v257, 0
    %v365 = vsel %vm276, %v258, 0
    %v368 = vsel %vm276, %v259, 0
    %v371 = vsel %vm276, %v260, 0
    %vm373 = vcmask 1041408
    %v375 = vsel %vm373, %v273, 0
    %377 = vmatpush.bf16.msra.mxu0 0
    %378 = vmatpush.bf16.msra.mxu0 0
    %379 = vmatpush.bf16.msra.mxu0 0
    %380 = vmatpush.bf16.msra.mxu0 0
    %381 = vmatpush.bf16.msra.mxu0 0
    %382 = vmatpush.bf16.msra.mxu0 %v375
    %383 = vmatpush.bf16.msra.mxu0 %v272
    %384 = vmatpush.bf16.msra.mxu0 %v271
    %385 = vmatmul.bf16.gmra.mxu0 %v278
    %v386 = vpop.f32.mrf.mxu0
    %v387 = vadd.f32 %v99, %v386
    %v388 = vpop.f32.mrf.mxu0
    %v389 = vadd.f32 %v99, %v388
    %390 = vmatmul.bf16.gmra.mxu0 %v281
    %v391 = vpop.f32.mrf.mxu0
    %v392 = vadd.f32 %v99, %v391
    %v393 = vpop.f32.mrf.mxu0
    %v394 = vadd.f32 %v99, %v393
    %395 = vmatmul.bf16.gmra.mxu0 %v284
    %v396 = vpop.f32.mrf.mxu0
    %v397 = vadd.f32 %v99, %v396
    %v398 = vpop.f32.mrf.mxu0
    %v399 = vadd.f32 %v99, %v398
    %400 = vmatmul.bf16.gmra.mxu0 %v287
    %v401 = vpop.f32.mrf.mxu0
    %v402 = vadd.f32 %v99, %v401
    %v403 = vpop.f32.mrf.mxu0
    %v404 = vadd.f32 %v99, %v403
    %405 = vmatmul.bf16.gmra.mxu0 %v290
    %v406 = vpop.f32.mrf.mxu0
    %v407 = vadd.f32 %v99, %v406
    %v408 = vpop.f32.mrf.mxu0
    %v409 = vadd.f32 %v99, %v408
    %410 = vmatmul.bf16.gmra.mxu0 %v293
    %v411 = vpop.f32.mrf.mxu0
    %v412 = vadd.f32 %v99, %v411
    %v413 = vpop.f32.mrf.mxu0
    %v414 = vadd.f32 %v99, %v413
    %415 = vmatmul.bf16.gmra.mxu0 %v296
    %v416 = vpop.f32.mrf.mxu0
    %v417 = vadd.f32 %v99, %v416
    %v418 = vpop.f32.mrf.mxu0
    %v419 = vadd.f32 %v99, %v418
    %420 = vmatmul.bf16.gmra.mxu0 %v299
    %v421 = vpop.f32.mrf.mxu0
    %v422 = vadd.f32 %v99, %v421
    %v423 = vpop.f32.mrf.mxu0
    %v424 = vadd.f32 %v99, %v423
    %425 = vmatmul.bf16.gmra.mxu0 %v302
    %v426 = vpop.f32.mrf.mxu0
    %v427 = vadd.f32 %v99, %v426
    %v428 = vpop.f32.mrf.mxu0
    %v429 = vadd.f32 %v99, %v428
    %430 = vmatmul.bf16.gmra.mxu0 %v305
    %v431 = vpop.f32.mrf.mxu0
    %v432 = vadd.f32 %v99, %v431
    %v433 = vpop.f32.mrf.mxu0
    %v434 = vadd.f32 %v99, %v433
    %435 = vmatmul.bf16.gmra.mxu0 %v308
    %v436 = vpop.f32.mrf.mxu0
    %v437 = vadd.f32 %v99, %v436
    %v438 = vpop.f32.mrf.mxu0
    %v439 = vadd.f32 %v99, %v438
    %440 = vmatmul.bf16.gmra.mxu0 %v311
    %v441 = vpop.f32.mrf.mxu0
    %v442 = vadd.f32 %v99, %v441
    %v443 = vpop.f32.mrf.mxu0
    %v444 = vadd.f32 %v99, %v443
    %445 = vmatmul.bf16.gmra.mxu0 %v314
    %v446 = vpop.f32.mrf.mxu0
    %v447 = vadd.f32 %v99, %v446
    %v448 = vpop.f32.mrf.mxu0
    %v449 = vadd.f32 %v99, %v448
    %450 = vmatmul.bf16.gmra.mxu0 %v317
    %v451 = vpop.f32.mrf.mxu0
    %v452 = vadd.f32 %v99, %v451
    %v453 = vpop.f32.mrf.mxu0
    %v454 = vadd.f32 %v99, %v453
    %455 = vmatmul.bf16.gmra.mxu0 %v320
    %v456 = vpop.f32.mrf.mxu0
    %v457 = vadd.f32 %v99, %v456
    %v458 = vpop.f32.mrf.mxu0
    %v459 = vadd.f32 %v99, %v458
    %460 = vmatmul.bf16.gmra.mxu0 %v323
    %v461 = vpop.f32.mrf.mxu0
    %v462 = vadd.f32 %v99, %v461
    %v463 = vpop.f32.mrf.mxu0
    %v464 = vadd.f32 %v99, %v463
    %465 = vmatmul.bf16.gmra.mxu0 %v326
    %v466 = vpop.f32.mrf.mxu0
    %v467 = vadd.f32 %v99, %v466
    %v468 = vpop.f32.mrf.mxu0
    %v469 = vadd.f32 %v99, %v468
    %470 = vmatmul.bf16.gmra.mxu0 %v329
    %v471 = vpop.f32.mrf.mxu0
    %v472 = vadd.f32 %v99, %v471
    %v473 = vpop.f32.mrf.mxu0
    %v474 = vadd.f32 %v99, %v473
    %475 = vmatmul.bf16.gmra.mxu0 %v332
    %v476 = vpop.f32.mrf.mxu0
    %v477 = vadd.f32 %v99, %v476
    %v478 = vpop.f32.mrf.mxu0
    %v479 = vadd.f32 %v99, %v478
    %480 = vmatmul.bf16.gmra.mxu0 %v335
    %v481 = vpop.f32.mrf.mxu0
    %v482 = vadd.f32 %v99, %v481
    %v483 = vpop.f32.mrf.mxu0
    %v484 = vadd.f32 %v99, %v483
    %485 = vmatmul.bf16.gmra.mxu0 %v338
    %v486 = vpop.f32.mrf.mxu0
    %v487 = vadd.f32 %v99, %v486
    %v488 = vpop.f32.mrf.mxu0
    %v489 = vadd.f32 %v99, %v488
    %490 = vmatmul.bf16.gmra.mxu0 %v341
    %v491 = vpop.f32.mrf.mxu0
    %v492 = vadd.f32 %v99, %v491
    %v493 = vpop.f32.mrf.mxu0
    %v494 = vadd.f32 %v99, %v493
    %495 = vmatmul.bf16.gmra.mxu0 %v344
    %v496 = vpop.f32.mrf.mxu0
    %v497 = vadd.f32 %v99, %v496
    %v498 = vpop.f32.mrf.mxu0
    %v499 = vadd.f32 %v99, %v498
    %500 = vmatmul.bf16.gmra.mxu0 %v347
    %v501 = vpop.f32.mrf.mxu0
    %v502 = vadd.f32 %v99, %v501
    %v503 = vpop.f32.mrf.mxu0
    %v504 = vadd.f32 %v99, %v503
    %505 = vmatmul.bf16.gmra.mxu0 %v350
    %v506 = vpop.f32.mrf.mxu0
    %v507 = vadd.f32 %v99, %v506
    %v508 = vpop.f32.mrf.mxu0
    %v509 = vadd.f32 %v99, %v508
    %510 = vmatmul.bf16.gmra.mxu0 %v353
    %v511 = vpop.f32.mrf.mxu0
    %v512 = vadd.f32 %v99, %v511
    %v513 = vpop.f32.mrf.mxu0
    %v514 = vadd.f32 %v99, %v513
    %515 = vmatmul.bf16.gmra.mxu0 %v356
    %v516 = vpop.f32.mrf.mxu0
    %v517 = vadd.f32 %v99, %v516
    %v518 = vpop.f32.mrf.mxu0
    %v519 = vadd.f32 %v99, %v518
    %520 = vmatmul.bf16.gmra.mxu0 %v359
    %v521 = vpop.f32.mrf.mxu0
    %v522 = vadd.f32 %v99, %v521
    %v523 = vpop.f32.mrf.mxu0
    %v524 = vadd.f32 %v99, %v523
    %525 = vmatmul.bf16.gmra.mxu0 %v362
    %v526 = vpop.f32.mrf.mxu0
    %v527 = vadd.f32 %v99, %v526
    %v528 = vpop.f32.mrf.mxu0
    %v529 = vadd.f32 %v99, %v528
    %530 = vmatmul.bf16.gmra.mxu0 %v365
    %v531 = vpop.f32.mrf.mxu0
    %v532 = vadd.f32 %v99, %v531
    %v533 = vpop.f32.mrf.mxu0
    %v534 = vadd.f32 %v99, %v533
    %535 = vmatmul.bf16.gmra.mxu0 %v368
    %v536 = vpop.f32.mrf.mxu0
    %v537 = vadd.f32 %v99, %v536
    %v538 = vpop.f32.mrf.mxu0
    %v539 = vadd.f32 %v99, %v538
    %540 = vmatmul.bf16.gmra.mxu0 %v371
    %v541 = vpop.f32.mrf.mxu0
    %v542 = vadd.f32 %v99, %v541
    %v543 = vpop.f32.mrf.mxu0
    %v544 = vadd.f32 %v99, %v543
    %545 = vdwg.mxu0
    %v546 = vmax.f32 %v387, 0.0
    %v547 = vmax.f32 %v389, 0.0
    %v548 = vmax.f32 %v392, 0.0
    %v549 = vmax.f32 %v394, 0.0
    %v550 = vmax.f32 %v397, 0.0
    %v551 = vmax.f32 %v399, 0.0
    %v552 = vmax.f32 %v402, 0.0
    %v553 = vmax.f32 %v404, 0.0
    %v554 = vmax.f32 %v407, 0.0
    %v555 = vmax.f32 %v409, 0.0
    %v556 = vmax.f32 %v412, 0.0
    %v557 = vmax.f32 %v414, 0.0
    %v558 = vmax.f32 %v417, 0.0
    %v559 = vmax.f32 %v419, 0.0
    %v560 = vmax.f32 %v422, 0.0
    %v561 = vmax.f32 %v424, 0.0
    %v562 = vmax.f32 %v427, 0.0
    %v563 = vmax.f32 %v429, 0.0
    %v564 = vmax.f32 %v432, 0.0
    %v565 = vmax.f32 %v434, 0.0
    %v566 = vmax.f32 %v437, 0.0
    %v567 = vmax.f32 %v439, 0.0
    %v568 = vmax.f32 %v442, 0.0
    %v569 = vmax.f32 %v444, 0.0
    %v570 = vmax.f32 %v447, 0.0
    %v571 = vmax.f32 %v449, 0.0
    %v572 = vmax.f32 %v452, 0.0
    %v573 = vmax.f32 %v454, 0.0
    %v574 = vmax.f32 %v457, 0.0
    %v575 = vmax.f32 %v459, 0.0
    %v576 = vmax.f32 %v462, 0.0
    %v577 = vmax.f32 %v464, 0.0
    %v578 = vmax.f32 %v467, 0.0
    %v579 = vmax.f32 %v469, 0.0
    %v580 = vmax.f32 %v472, 0.0
    %v581 = vmax.f32 %v474, 0.0
    %v582 = vmax.f32 %v477, 0.0
    %v583 = vmax.f32 %v479, 0.0
    %v584 = vmax.f32 %v482, 0.0
    %v585 = vmax.f32 %v484, 0.0
    %v586 = vmax.f32 %v487, 0.0
    %v587 = vmax.f32 %v489, 0.0
    %v588 = vmax.f32 %v492, 0.0
    %v589 = vmax.f32 %v494, 0.0
    %v590 = vmax.f32 %v497, 0.0
    %v591 = vmax.f32 %v499, 0.0
    %v592 = vmax.f32 %v502, 0.0
    %v593 = vmax.f32 %v504, 0.0
    %v594 = vmax.f32 %v507, 0.0
    %v595 = vmax.f32 %v509, 0.0
    %v596 = vmax.f32 %v512, 0.0
    %v597 = vmax.f32 %v514, 0.0
    %v598 = vmax.f32 %v517, 0.0
    %v599 = vmax.f32 %v519, 0.0
    %v600 = vmax.f32 %v522, 0.0
    %v601 = vmax.f32 %v524, 0.0
    %v602 = vmax.f32 %v527, 0.0
    %v603 = vmax.f32 %v529, 0.0
    %v604 = vmax.f32 %v532, 0.0
    %v605 = vmax.f32 %v534, 0.0
    %v606 = vmax.f32 %v537, 0.0
    %v607 = vmax.f32 %v539, 0.0
    %v608 = vmax.f32 %v542, 0.0
    %v609 = vmax.f32 %v544, 0.0
    %vm610 = vcmask 261120
    %v611 = vsel %vm610, %v546, 0.0
    %v612 = vsel %vm610, %v547, 0.0
    %v613 = vadd.f32 %v611, %v612
    %v614 = vsel %vm610, %v548, 0.0
    %v615 = vadd.f32 %v613, %v614
    %v616 = vsel %vm610, %v549, 0.0
    %v617 = vadd.f32 %v615, %v616
    %v618 = vsel %vm610, %v550, 0.0
    %v619 = vadd.f32 %v617, %v618
    %v620 = vsel %vm610, %v551, 0.0
    %v621 = vadd.f32 %v619, %v620
    %v622 = vsel %vm610, %v552, 0.0
    %v623 = vadd.f32 %v621, %v622
    %v624 = vsel %vm610, %v553, 0.0
    %v625 = vadd.f32 %v623, %v624
    %v626 = vsel %vm610, %v554, 0.0
    %v627 = vadd.f32 %v625, %v626
    %v628 = vsel %vm610, %v555, 0.0
    %v629 = vadd.f32 %v627, %v628
    %v630 = vsel %vm610, %v556, 0.0
    %v631 = vadd.f32 %v629, %v630
    %v632 = vsel %vm610, %v557, 0.0
    %v633 = vadd.f32 %v631, %v632
    %v634 = vsel %vm610, %v558, 0.0
    %v635 = vadd.f32 %v633, %v634
    %v636 = vsel %vm610, %v559, 0.0
    %v637 = vadd.f32 %v635, %v636
    %v638 = vsel %vm610, %v560, 0.0
    %v639 = vadd.f32 %v637, %v638
    %v640 = vsel %vm610, %v561, 0.0
    %v641 = vadd.f32 %v639, %v640
    %v642 = vsel %vm610, %v562, 0.0
    %v643 = vadd.f32 %v641, %v642
    %v644 = vsel %vm610, %v563, 0.0
    %v645 = vadd.f32 %v643, %v644
    %v646 = vsel %vm610, %v564, 0.0
    %v647 = vadd.f32 %v645, %v646
    %v648 = vsel %vm610, %v565, 0.0
    %v649 = vadd.f32 %v647, %v648
    %v650 = vsel %vm610, %v566, 0.0
    %v651 = vadd.f32 %v649, %v650
    %v652 = vsel %vm610, %v567, 0.0
    %v653 = vadd.f32 %v651, %v652
    %v654 = vsel %vm610, %v568, 0.0
    %v655 = vadd.f32 %v653, %v654
    %v656 = vsel %vm610, %v569, 0.0
    %v657 = vadd.f32 %v655, %v656
    %v658 = vsel %vm610, %v570, 0.0
    %v659 = vadd.f32 %v657, %v658
    %v660 = vsel %vm610, %v571, 0.0
    %v661 = vadd.f32 %v659, %v660
    %v662 = vsel %vm610, %v572, 0.0
    %v663 = vadd.f32 %v661, %v662
    %v664 = vsel %vm610, %v573, 0.0
    %v665 = vadd.f32 %v663, %v664
    %v666 = vsel %vm610, %v574, 0.0
    %v667 = vadd.f32 %v665, %v666
    %v668 = vsel %vm610, %v575, 0.0
    %v669 = vadd.f32 %v667, %v668
    %v670 = vsel %vm610, %v576, 0.0
    %v671 = vadd.f32 %v669, %v670
    %v672 = vsel %vm610, %v577, 0.0
    %v673 = vadd.f32 %v671, %v672
    %v674 = vrot.slane %v673, 4
    %v675 = vadd.f32 %v673, %v674
    %v676 = vrot.slane %v675, 2
    %v677 = vadd.f32 %v675, %v676
    %v678 = vrot.slane %v677, 1
    %v679 = vadd.f32 %v677, %v678
    %v680 = vsel %vm610, %v578, 0.0
    %v681 = vsel %vm610, %v579, 0.0
    %v682 = vadd.f32 %v680, %v681
    %v683 = vsel %vm610, %v580, 0.0
    %v684 = vadd.f32 %v682, %v683
    %v685 = vsel %vm610, %v581, 0.0
    %v686 = vadd.f32 %v684, %v685
    %v687 = vsel %vm610, %v582, 0.0
    %v688 = vadd.f32 %v686, %v687
    %v689 = vsel %vm610, %v583, 0.0
    %v690 = vadd.f32 %v688, %v689
    %v691 = vsel %vm610, %v584, 0.0
    %v692 = vadd.f32 %v690, %v691
    %v693 = vsel %vm610, %v585, 0.0
    %v694 = vadd.f32 %v692, %v693
    %v695 = vsel %vm610, %v586, 0.0
    %v696 = vadd.f32 %v694, %v695
    %v697 = vsel %vm610, %v587, 0.0
    %v698 = vadd.f32 %v696, %v697
    %v699 = vsel %vm610, %v588, 0.0
    %v700 = vadd.f32 %v698, %v699
    %v701 = vsel %vm610, %v589, 0.0
    %v702 = vadd.f32 %v700, %v701
    %v703 = vsel %vm610, %v590, 0.0
    %v704 = vadd.f32 %v702, %v703
    %v705 = vsel %vm610, %v591, 0.0
    %v706 = vadd.f32 %v704, %v705
    %v707 = vsel %vm610, %v592, 0.0
    %v708 = vadd.f32 %v706, %v707
    %v709 = vsel %vm610, %v593, 0.0
    %v710 = vadd.f32 %v708, %v709
    %v711 = vsel %vm610, %v594, 0.0
    %v712 = vadd.f32 %v710, %v711
    %v713 = vsel %vm610, %v595, 0.0
    %v714 = vadd.f32 %v712, %v713
    %v715 = vsel %vm610, %v596, 0.0
    %v716 = vadd.f32 %v714, %v715
    %v717 = vsel %vm610, %v597, 0.0
    %v718 = vadd.f32 %v716, %v717
    %v719 = vsel %vm610, %v598, 0.0
    %v720 = vadd.f32 %v718, %v719
    %v721 = vsel %vm610, %v599, 0.0
    %v722 = vadd.f32 %v720, %v721
    %v723 = vsel %vm610, %v600, 0.0
    %v724 = vadd.f32 %v722, %v723
    %v725 = vsel %vm610, %v601, 0.0
    %v726 = vadd.f32 %v724, %v725
    %v727 = vsel %vm610, %v602, 0.0
    %v728 = vadd.f32 %v726, %v727
    %v729 = vsel %vm610, %v603, 0.0
    %v730 = vadd.f32 %v728, %v729
    %v731 = vsel %vm610, %v604, 0.0
    %v732 = vadd.f32 %v730, %v731
    %v733 = vsel %vm610, %v605, 0.0
    %v734 = vadd.f32 %v732, %v733
    %v735 = vsel %vm610, %v606, 0.0
    %v736 = vadd.f32 %v734, %v735
    %v737 = vsel %vm610, %v607, 0.0
    %v738 = vadd.f32 %v736, %v737
    %v739 = vsel %vm610, %v608, 0.0
    %v740 = vadd.f32 %v738, %v739
    %v741 = vsel %vm610, %v609, 0.0
    %v742 = vadd.f32 %v740, %v741
    %v743 = vrot.slane %v742, 4
    %v744 = vadd.f32 %v742, %v743
    %v745 = vrot.slane %v744, 2
    %v746 = vadd.f32 %v744, %v745
    %v747 = vrot.slane %v746, 1
    %v748 = vadd.f32 %v746, %v747
    %v749 = vpack.c.bf16 %v679, %v679
    %v750 = vpack.c.bf16 %v748, %v748
    %v751 = vld [vmem:[%s3] sm:$0xf]
    %v752 = vld [vmem:[%s3 + $0x4] sm:$0xf]
    %v753 = vld [vmem:[%s3 + $0x8] sm:$0xf]
    %v754 = vld [vmem:[%s3 + $0xc] sm:$0xf]
    %v755 = vld [vmem:[%s4] sm:$0x1]
    %v757 = vperm.slane %v755, 0
    %v761 = vunpack.c.l.b16 %v749
    %v762 = vunpack.c.l.b16 %v750
    %vm763 = vcmask 1041409
    %v764 = vsel %vm763, %v762, %v761
    %v765 = vpack.c.b16 %v764, %v764
    %v770 = vunpack.c.l.b16 %v751
    %v771 = vunpack.c.l.b16 %v752
    %v772 = vunpack.c.l.b16 %v753
    %v773 = vunpack.c.l.b16 %v754
    %v774 = vpack.c.b16 %v771, %v770
    %v775 = vpack.c.b16 %v773, %v772
    %v779 = vsel %vm610, %v765, 0
    %781 = vmatpush.bf16.msra.mxu0 0
    %782 = vmatpush.bf16.msra.mxu0 0
    %783 = vmatpush.bf16.msra.mxu0 0
    %784 = vmatpush.bf16.msra.mxu0 0
    %785 = vmatpush.bf16.msra.mxu0 0
    %786 = vmatpush.bf16.msra.mxu0 0
    %787 = vmatpush.bf16.msra.mxu0 %v775
    %788 = vmatpush.bf16.msra.mxu0 %v774
    %789 = vmatmul.bf16.gmra.mxu0 %v779
    %v790 = vpop.f32.mrf.mxu0
    %v791 = vadd.f32 %v757, %v790
    %v792 = vpop.f32.mrf.mxu0
    %793 = vdwg.mxu0
    %v794 = vmax.f32 %v791, 0.0
    %v795 = vpack.c.bf16 %v794, %v794
    %v796 = vld [vmem:[%s5] sm:$0xf]
    %v797 = vld [vmem:[%s5 + $0x4] sm:$0xf]
    %v798 = vld [vmem:[%s6] sm:$0x1]
    %v800 = vperm.slane %v798, 0
    %v804 = vunpack.c.l.b16 %v796
    %v805 = vunpack.c.l.b16 %v797
    %v806 = vpack.c.b16 %v805, %v804
    %vm808 = vcmask 130048
    %v810 = vsel %vm808, %v795, 0
    %812 = vmatpush.bf16.msra.mxu0 0
    %813 = vmatpush.bf16.msra.mxu0 0
    %814 = vmatpush.bf16.msra.mxu0 0
    %815 = vmatpush.bf16.msra.mxu0 0
    %816 = vmatpush.bf16.msra.mxu0 0
    %817 = vmatpush.bf16.msra.mxu0 0
    %818 = vmatpush.bf16.msra.mxu0 0
    %819 = vmatpush.bf16.msra.mxu0 %v806
    %820 = vmatmul.bf16.gmra.mxu0 %v810
    %v821 = vpop.f32.mrf.mxu0
    %v822 = vadd.f32 %v800, %v821
    %v823 = vpop.f32.mrf.mxu0
    %824 = vdwg.mxu0
    %825 = vst [vmem:[#allocation2] sm:$0x3] %v822
    // Predicated region
    $region30: #{tpu_custom_call.1} parent=1 // pred_check
      _
    $region31: #{tpu_custom_call.1} parent=1 // pred_check_branch
      %827 = sbr.rel (0) target = $region33
    $region32: #{tpu_custom_call.1} parent=1 // pred_region
      %829 = vsyncadd [#allocation3], 0
      %s831 = sshll.u32 [#allocation2], 4
      %s832 = int_to_ptr.vmem [resolvable:$true] %s831
      %s833 = sshll.u32 %s7, 4
      %s834 = int_to_ptr.hbm [resolvable:$true] %s833
      %836 = dma.vmem_to_hbm [thread:$0]  %s832, 32, %s834, [#allocation3]
    $region33: #{tpu_custom_call.1} parent=1 // pred_fallthru
      _
    // Predicated region
    $region34: #{tpu_custom_call.1} parent=1 // pred_check
      _
    $region35: #{tpu_custom_call.1} parent=1 // pred_check_branch
      %838 = sbr.rel (0) target = $region37
    $region36: #{tpu_custom_call.1} parent=1 // pred_region
      %840 = dma.done [#allocation3], 32
    $region37: #{tpu_custom_call.1} parent=1 // pred_fallthru
      _
    %841 = vsyncpa [#allocation3], 1

</llo_original>
